<compile_context>
chip_gen: v6e
topology: v6e:2x2x1
jax: 0.10.0
libtpu: 0.0.40
codegen_flags: <defaults>
</compile_context>

<pallas_src>
import functools

import jax
import jax.numpy as jnp
from jax import lax
from jax.experimental import pallas as pl
from jax.experimental.pallas import tpu as pltpu
import numpy as np


def _round_up(x, m):
    return ((x + m - 1) // m) * m


# ----------------------------------------------------------------------------
# Pallas kernel: fused proto_loss over all granularity levels
# ----------------------------------------------------------------------------
def _pcl_fused_kernel(z1_ref, c_ref, y_ref, out_ref, *, level_sizes, level_pads):
    z1 = z1_ref[...]                          # (tile_N, D) f32
    cn = c_ref[...]                           # (K_total, D) bf16, pre-normalized * 1/tau
    # y_ref: (L, 1, tile_N) i32, per-level *local* cluster index in [0, K_l)

    # F.normalize(z1, dim=-1): z1 * rsqrt(max(||z1||^2, 1e-24)) == z1 / max(||z1||, 1e-12)
    z1n = z1 * lax.rsqrt(jnp.maximum(jnp.sum(z1 * z1, axis=-1, keepdims=True),
                                     1e-24))

    # Transposed similarity: (K_total, tile_N) = cos_sim / tau.
    # bf16 operands, f32 accumulation on the MXU.
    sim = lax.dot_general(
        cn, z1n.astype(jnp.bfloat16),
        (((1,), (1,)), ((), ())), preferred_element_type=jnp.float32)

    tn = sim.shape[1]
    total = jnp.zeros((1, tn), jnp.float32)

    off = 0
    for l, (kl, kp) in enumerate(zip(level_sizes, level_pads)):
        s_l = sim[off:off + kp, :]                            # 8-row (sublane) aligned slice
        off += kp
        rid = lax.broadcasted_iota(jnp.int32, s_l.shape, 0)   # cluster id (local)
        valid = rid < kl                                      # mask padded slots
        y_l = y_ref[l]                                        # (1, tile_N) i32

        # -log(exp(s_pos) / sum_valid exp(s)) == m + log(sum exp(s - m)) - s_pos
        m = jnp.max(jnp.where(valid, s_l, -jnp.inf), axis=0, keepdims=True)
        rs = jnp.sum(jnp.where(valid, jnp.exp(s_l - m), 0.0),
                     axis=0, keepdims=True)
        pos = jnp.sum(jnp.where(rid == y_l, s_l, 0.0), axis=0, keepdims=True)
        total = total + (m + jnp.log(rs) - pos)

    out_ref[...] = total                                      # lane-dense (1, tile_N)


def _choose_tile_n(n):
    # Large tiles amortize the ~0.35us/step grid cost and widen the output
    # store, but keep grid_n >= 2 when possible so v7x megacore has work for
    # both TensorCores (no-op on v5e/v6e).
    if n < 128:
        return n
    for cand in (1024, 512, 256, 128):
        if n >= 2 * cand:
            return cand
    return 128


def fused_proto_loss(z1, centroids_list, labels_list, tau):
    """Per-sample loss, summed over granularity levels. Returns shape (N,)."""
    n, d = z1.shape
    num_levels = len(centroids_list)
    level_sizes = tuple(int(c.shape[0]) for c in centroids_list)
    # Only sublane alignment (8 rows, f32) is needed for the in-kernel slices.
    level_pads = tuple(_round_up(k, 8) for k in level_sizes)
    k_total = int(sum(level_pads))
    inv_tau = 1.0 / float(tau)

    # Normalize + fold 1/tau + cast to bf16 ONCE in the wrapper (hoisted out of
    # the kernel, which re-ran it every grid step on a resident operand).
    slabs = []
    for c, k, kp in zip(centroids_list, level_sizes, level_pads):
        c32 = c.astype(jnp.float32)
        norm = jnp.maximum(jnp.sqrt(jnp.sum(c32 * c32, axis=-1, keepdims=True)),
                           1e-12)
        cn = (c32 / norm) * inv_tau
        slabs.append(jnp.pad(cn, ((0, kp - k), (0, 0))))
    cpad = jnp.concatenate(slabs, axis=0).astype(jnp.bfloat16)   # (K_total, D)

    tile_n = _choose_tile_n(n)
    n_pad = _round_up(n, tile_n)

    # TODO(synk): if z1 is produced in bf16 upstream, feed it through directly
    # (halves the dominant HBM read); a standalone wrapper-side cast is net-zero.
    z1p = jnp.pad(z1.astype(jnp.float32), ((0, n_pad - n), (0, 0)))
    y = jnp.stack([lab.astype(jnp.int32) for lab in labels_list], axis=0)  # (L, N)
    yp = jnp.pad(y, ((0, 0), (0, n_pad - n))).reshape(num_levels, 1, n_pad)

    grid_n = n_pad // tile_n

    # Per-step VMEM footprint (double-buffered inputs + sim intermediate).
    est = (2 * tile_n * d * 4                 # z1 tile, f32, double-buffered
           + 2 * k_total * d * 2              # centroids, bf16 (resident)
           + 2 * num_levels * tile_n * 4      # labels
           + 2 * tile_n * 4                   # output row
           + k_total * tile_n * 4             # sim intermediate
           + (2 << 20))                       # vreg-spill / compiler headroom
    vmem_limit = int(min(64 << 20, max(32 << 20, 2 * est)))

    out = pl.pallas_call(
        functools.partial(
            _pcl_fused_kernel,
            level_sizes=level_sizes,
            level_pads=level_pads),
        out_shape=jax.ShapeDtypeStruct((1, n_pad), jnp.float32),
        grid=(grid_n,),
        in_specs=[
            pl.BlockSpec((tile_n, d), lambda i: (i, 0)),            # z1 tile
            pl.BlockSpec((k_total, d), lambda i: (0, 0)),           # centroids resident (bf16)
            pl.BlockSpec((num_levels, 1, tile_n), lambda i: (0, 0, i)),  # labels
        ],
        out_specs=pl.BlockSpec((1, tile_n), lambda i: (0, i)),
        compiler_params=pltpu.CompilerParams(
            dimension_semantics=("parallel",),
            vmem_limit_bytes=vmem_limit),
    )(z1p, cpad, yp)
    return out[0, :n]


# ----------------------------------------------------------------------------
# Glue: deterministic KMeans (Lloyd's, matmul-form distances) replacing faiss
# ----------------------------------------------------------------------------
def kmeans_jax(x, k, niter=20):
    x = x.astype(jnp.float32)
    x_sq = jnp.sum(x * x, axis=1, keepdims=True)          # reused every iteration

    def assign_fn(c):
        c_sq = jnp.sum(c * c, axis=1)
        d2 = x_sq - 2.0 * jnp.dot(x, c.T) + c_sq[None, :]  # ||x-c||^2, matmul form
        return jnp.argmin(d2, axis=1)

    def body(_, c):
        a = assign_fn(c)
        onehot = (a[:, None] == jnp.arange(k)[None, :]).astype(x.dtype)
        counts = jnp.sum(onehot, axis=0)
        new_c = jnp.dot(onehot.T, x) / jnp.maximum(counts[:, None], 1.0)
        return jnp.where(counts[:, None] > 0, new_c, c)    # keep old if empty

    centroids = lax.fori_loop(0, niter, body, x[:k])
    assign = assign_fn(centroids)
    return centroids.astype(jnp.float32), assign.astype(jnp.int32)


def infer_n_protos(k, proto_granularity):
    n_cluster_list = []
    for i, g in enumerate(proto_granularity):
        if i == 0:
            n_cluster_list.append(int(np.floor(k * g)))
        else:
            n_cluster_list.append(
                int(max(n_cluster_list[i - 1] + 1, np.ceil(k * g))))
    return n_cluster_list


class PCLPallas:
    def __init__(self, n_clusters, proto_granularity, proto_tau):
        self.k = n_clusters
        self.proto_granularity = [float(p) for p in proto_granularity]
        self.proto_tau = float(proto_tau)
        self.n_cluster_list = infer_n_protos(self.k, self.proto_granularity)

    def __call__(self, z1, z2):
        cluster_assignment = []
        centroids_list = []
        for n_cluster in self.n_cluster_list:
            centroids, y_pred = kmeans_jax(z2, n_cluster, niter=20)
            cluster_assignment.append(y_pred)
            centroids_list.append(centroids)
        per_sample = fused_proto_loss(
            z1, centroids_list, cluster_assignment, self.proto_tau)
        proto_loss = jnp.mean(per_sample) / len(self.n_cluster_list)
        return proto_loss, cluster_assignment, centroids_list


if __name__ == "__main__":
    key = jax.random.PRNGKey(0)
    k1, k2 = jax.random.split(key)
    N, D = 16, 32                              # batch of embeddings, feature dim
    z1 = jax.random.normal(k1, (N, D), jnp.float32)
    z2 = jax.random.normal(k2, (N, D), jnp.float32)

    model = PCLPallas(n_clusters=8, proto_granularity=[0.5, 0.75, 1.0],
                      proto_tau=0.5)
    loss, assigns, cents = model(z1, z2)
    loss = jax.block_until_ready(loss)
    assert jnp.isfinite(loss), "proto loss is not finite"
    print("KERNEL_OK")
</pallas_src>

<mosaic_0001>
module attributes {stable_mosaic.version = 11 : i64} {
  func.func @_pcl_fused_kernel(%arg0: i32, %arg1: memref<16x32xf32, #tpu.memory_space<vmem>>, %arg2: memref<24x32xbf16, #tpu.memory_space<vmem>>, %arg3: memref<3x1x16xi32, #tpu.memory_space<vmem>>, %arg4: memref<1x16xf32, #tpu.memory_space<vmem>>) attributes {dimension_semantics = [#tpu.dimension_semantics<parallel>], iteration_bounds = array<i64: 1>, scalar_prefetch = 0 : i64, scratch_operands = 0 : i64, tpu.core_type = #tpu.core_type<tc>, window_params = [{transform_indices = @transform_0, window_bounds = array<i64: 16, 32>}, {pipeline_mode = #tpu.pipeline_mode<synchronous>, transform_indices = @transform_1, window_bounds = array<i64: 24, 32>}, {transform_indices = @transform_2, window_bounds = array<i64: 3, 1, 16>}, {transform_indices = @transform_3, window_bounds = array<i64: 1, 16>}]} {
    %c0 = arith.constant 0 : index
    %c0_0 = arith.constant 0 : index
    %0 = vector.load %arg1[%c0, %c0_0] : memref<16x32xf32, #tpu.memory_space<vmem>>, vector<16x32xf32>
    %c0_1 = arith.constant 0 : index
    %c0_2 = arith.constant 0 : index
    %1 = vector.load %arg2[%c0_1, %c0_2] : memref<24x32xbf16, #tpu.memory_space<vmem>>, vector<24x32xbf16>
    %2 = arith.mulf %0, %0 : vector<16x32xf32>
    %cst = arith.constant dense<0.000000e+00> : vector<16xf32>
    %3 = vector.multi_reduction <add>, %2, %cst [1] : vector<16x32xf32> to vector<16xf32>
    %4 = vector.shape_cast %3 : vector<16xf32> to vector<16x1xf32>
    %cst_3 = arith.constant 1.000000e-24 : f32
    %5 = vector.broadcast %cst_3 : f32 to vector<16x1xf32>
    %6 = arith.maximumf %4, %5 : vector<16x1xf32>
    %7 = math.rsqrt %6 : vector<16x1xf32>
    %8 = vector.broadcast %7 : vector<16x1xf32> to vector<16x32xf32>
    %9 = arith.mulf %0, %8 : vector<16x32xf32>
    %10 = arith.truncf %9 : vector<16x32xf32> to vector<16x32xbf16>
    %cst_4 = arith.constant dense<0.000000e+00> : vector<24x16xf32>
    %11 = tpu.matmul %1, %10, %cst_4 {dimension_numbers = #tpu.dot_dimension_numbers<[1], [1], [0], [0], [0, 0, 1, 0], [], []>} : vector<24x32xbf16>, vector<16x32xbf16>, vector<24x16xf32> -> vector<24x16xf32>
    %cst_5 = arith.constant 0.000000e+00 : f32
    %12 = vector.broadcast %cst_5 : f32 to vector<1x16xf32>
    %13 = vector.extract_strided_slice %11 {offsets = [0, 0], sizes = [8, 16], strides = [1, 1]} : vector<24x16xf32> to vector<8x16xf32>
    %14 = tpu.iota {dimensions = array<i32: 0>} : vector<8x16xi32>
    %c4_i32 = arith.constant 4 : i32
    %15 = vector.broadcast %c4_i32 : i32 to vector<8x16xi32>
    %16 = arith.cmpi slt, %14, %15 : vector<8x16xi32>
    %c0_6 = arith.constant 0 : index
    %c0_7 = arith.constant 0 : index
    %c0_8 = arith.constant 0 : index
    %17 = vector.load %arg3[%c0_6, %c0_7, %c0_8] : memref<3x1x16xi32, #tpu.memory_space<vmem>>, vector<1x1x16xi32>
    %18 = vector.shape_cast %17 : vector<1x1x16xi32> to vector<1x16xi32>
    %cst_9 = arith.constant 0xFF800000 : f32
    %19 = vector.broadcast %cst_9 : f32 to vector<8x16xf32>
    %20 = arith.select %16, %13, %19 : vector<8x16xi1>, vector<8x16xf32>
    %cst_10 = arith.constant dense<0xFF800000> : vector<16xf32>
    %21 = vector.multi_reduction <maximumf>, %20, %cst_10 [0] : vector<8x16xf32> to vector<16xf32>
    %22 = vector.shape_cast %21 : vector<16xf32> to vector<1x16xf32>
    %23 = vector.broadcast %22 : vector<1x16xf32> to vector<8x16xf32>
    %24 = arith.subf %13, %23 : vector<8x16xf32>
    %25 = math.exp %24 : vector<8x16xf32>
    %cst_11 = arith.constant 0.000000e+00 : f32
    %26 = vector.broadcast %cst_11 : f32 to vector<8x16xf32>
    %27 = arith.select %16, %25, %26 : vector<8x16xi1>, vector<8x16xf32>
    %cst_12 = arith.constant dense<0.000000e+00> : vector<16xf32>
    %28 = vector.multi_reduction <add>, %27, %cst_12 [0] : vector<8x16xf32> to vector<16xf32>
    %29 = vector.shape_cast %28 : vector<16xf32> to vector<1x16xf32>
    %30 = vector.broadcast %18 : vector<1x16xi32> to vector<8x16xi32>
    %31 = arith.cmpi eq, %14, %30 : vector<8x16xi32>
    %cst_13 = arith.constant 0.000000e+00 : f32
    %32 = vector.broadcast %cst_13 : f32 to vector<8x16xf32>
    %33 = arith.select %31, %13, %32 : vector<8x16xi1>, vector<8x16xf32>
    %cst_14 = arith.constant dense<0.000000e+00> : vector<16xf32>
    %34 = vector.multi_reduction <add>, %33, %cst_14 [0] : vector<8x16xf32> to vector<16xf32>
    %35 = vector.shape_cast %34 : vector<16xf32> to vector<1x16xf32>
    %36 = math.log %29 : vector<1x16xf32>
    %37 = arith.addf %22, %36 : vector<1x16xf32>
    %38 = arith.subf %37, %35 : vector<1x16xf32>
    %39 = arith.addf %12, %38 : vector<1x16xf32>
    %40 = vector.extract_strided_slice %11 {offsets = [8, 0], sizes = [8, 16], strides = [1, 1]} : vector<24x16xf32> to vector<8x16xf32>
    %41 = tpu.iota {dimensions = array<i32: 0>} : vector<8x16xi32>
    %c6_i32 = arith.constant 6 : i32
    %42 = vector.broadcast %c6_i32 : i32 to vector<8x16xi32>
    %43 = arith.cmpi slt, %41, %42 : vector<8x16xi32>
    %c1 = arith.constant 1 : index
    %c0_15 = arith.constant 0 : index
    %c0_16 = arith.constant 0 : index
    %44 = vector.load %arg3[%c1, %c0_15, %c0_16] : memref<3x1x16xi32, #tpu.memory_space<vmem>>, vector<1x1x16xi32>
    %45 = vector.shape_cast %44 : vector<1x1x16xi32> to vector<1x16xi32>
    %cst_17 = arith.constant 0xFF800000 : f32
    %46 = vector.broadcast %cst_17 : f32 to vector<8x16xf32>
    %47 = arith.select %43, %40, %46 : vector<8x16xi1>, vector<8x16xf32>
    %cst_18 = arith.constant dense<0xFF800000> : vector<16xf32>
    %48 = vector.multi_reduction <maximumf>, %47, %cst_18 [0] : vector<8x16xf32> to vector<16xf32>
    %49 = vector.shape_cast %48 : vector<16xf32> to vector<1x16xf32>
    %50 = vector.broadcast %49 : vector<1x16xf32> to vector<8x16xf32>
    %51 = arith.subf %40, %50 : vector<8x16xf32>
    %52 = math.exp %51 : vector<8x16xf32>
    %cst_19 = arith.constant 0.000000e+00 : f32
    %53 = vector.broadcast %cst_19 : f32 to vector<8x16xf32>
    %54 = arith.select %43, %52, %53 : vector<8x16xi1>, vector<8x16xf32>
    %cst_20 = arith.constant dense<0.000000e+00> : vector<16xf32>
    %55 = vector.multi_reduction <add>, %54, %cst_20 [0] : vector<8x16xf32> to vector<16xf32>
    %56 = vector.shape_cast %55 : vector<16xf32> to vector<1x16xf32>
    %57 = vector.broadcast %45 : vector<1x16xi32> to vector<8x16xi32>
    %58 = arith.cmpi eq, %41, %57 : vector<8x16xi32>
    %cst_21 = arith.constant 0.000000e+00 : f32
    %59 = vector.broadcast %cst_21 : f32 to vector<8x16xf32>
    %60 = arith.select %58, %40, %59 : vector<8x16xi1>, vector<8x16xf32>
    %cst_22 = arith.constant dense<0.000000e+00> : vector<16xf32>
    %61 = vector.multi_reduction <add>, %60, %cst_22 [0] : vector<8x16xf32> to vector<16xf32>
    %62 = vector.shape_cast %61 : vector<16xf32> to vector<1x16xf32>
    %63 = math.log %56 : vector<1x16xf32>
    %64 = arith.addf %49, %63 : vector<1x16xf32>
    %65 = arith.subf %64, %62 : vector<1x16xf32>
    %66 = arith.addf %39, %65 : vector<1x16xf32>
    %67 = vector.extract_strided_slice %11 {offsets = [16, 0], sizes = [8, 16], strides = [1, 1]} : vector<24x16xf32> to vector<8x16xf32>
    %68 = tpu.iota {dimensions = array<i32: 0>} : vector<8x16xi32>
    %c8_i32 = arith.constant 8 : i32
    %69 = vector.broadcast %c8_i32 : i32 to vector<8x16xi32>
    %70 = arith.cmpi slt, %68, %69 : vector<8x16xi32>
    %c2 = arith.constant 2 : index
    %c0_23 = arith.constant 0 : index
    %c0_24 = arith.constant 0 : index
    %71 = vector.load %arg3[%c2, %c0_23, %c0_24] : memref<3x1x16xi32, #tpu.memory_space<vmem>>, vector<1x1x16xi32>
    %72 = vector.shape_cast %71 : vector<1x1x16xi32> to vector<1x16xi32>
    %cst_25 = arith.constant 0xFF800000 : f32
    %73 = vector.broadcast %cst_25 : f32 to vector<8x16xf32>
    %74 = arith.select %70, %67, %73 : vector<8x16xi1>, vector<8x16xf32>
    %cst_26 = arith.constant dense<0xFF800000> : vector<16xf32>
    %75 = vector.multi_reduction <maximumf>, %74, %cst_26 [0] : vector<8x16xf32> to vector<16xf32>
    %76 = vector.shape_cast %75 : vector<16xf32> to vector<1x16xf32>
    %77 = vector.broadcast %76 : vector<1x16xf32> to vector<8x16xf32>
    %78 = arith.subf %67, %77 : vector<8x16xf32>
    %79 = math.exp %78 : vector<8x16xf32>
    %cst_27 = arith.constant 0.000000e+00 : f32
    %80 = vector.broadcast %cst_27 : f32 to vector<8x16xf32>
    %81 = arith.select %70, %79, %80 : vector<8x16xi1>, vector<8x16xf32>
    %cst_28 = arith.constant dense<0.000000e+00> : vector<16xf32>
    %82 = vector.multi_reduction <add>, %81, %cst_28 [0] : vector<8x16xf32> to vector<16xf32>
    %83 = vector.shape_cast %82 : vector<16xf32> to vector<1x16xf32>
    %84 = vector.broadcast %72 : vector<1x16xi32> to vector<8x16xi32>
    %85 = arith.cmpi eq, %68, %84 : vector<8x16xi32>
    %cst_29 = arith.constant 0.000000e+00 : f32
    %86 = vector.broadcast %cst_29 : f32 to vector<8x16xf32>
    %87 = arith.select %85, %67, %86 : vector<8x16xi1>, vector<8x16xf32>
    %cst_30 = arith.constant dense<0.000000e+00> : vector<16xf32>
    %88 = vector.multi_reduction <add>, %87, %cst_30 [0] : vector<8x16xf32> to vector<16xf32>
    %89 = vector.shape_cast %88 : vector<16xf32> to vector<1x16xf32>
    %90 = math.log %83 : vector<1x16xf32>
    %91 = arith.addf %76, %90 : vector<1x16xf32>
    %92 = arith.subf %91, %89 : vector<1x16xf32>
    %93 = arith.addf %66, %92 : vector<1x16xf32>
    %c0_31 = arith.constant 0 : index
    %c0_32 = arith.constant 0 : index
    %94 = vector.load %arg4[%c0_31, %c0_32] : memref<1x16xf32, #tpu.memory_space<vmem>>, vector<1x16xf32>
    tpu.vector_store %arg4[%c0_31, %c0_32], %93 {strides = array<i32>} : memref<1x16xf32, #tpu.memory_space<vmem>>, vector<1x16xf32>,
    return
  }
  func.func @transform_0(%arg0: i32) -> (i32, i32) {
    %c0_i32 = arith.constant 0 : i32
    %c0_i32_0 = arith.constant 0 : i32
    return %arg0, %c0_i32 : i32, i32
  }
  func.func @transform_1(%arg0: i32) -> (i32, i32) {
    %c0_i32 = arith.constant 0 : i32
    %c0_i32_0 = arith.constant 0 : i32
    %c0_i32_1 = arith.constant 0 : i32
    return %c0_i32, %c0_i32_0 : i32, i32
  }
  func.func @transform_2(%arg0: i32) -> (i32, i32, i32) {
    %c0_i32 = arith.constant 0 : i32
    %c0_i32_0 = arith.constant 0 : i32
    %c0_i32_1 = arith.constant 0 : i32
    return %c0_i32, %c0_i32_0, %arg0 : i32, i32, i32
  }
  func.func @transform_3(%arg0: i32) -> (i32, i32) {
    %c0_i32 = arith.constant 0 : i32
    %c0_i32_0 = arith.constant 0 : i32
    return %c0_i32, %arg0 : i32, i32
  }
}

</mosaic_0001>

<llo_original>
// kernel: tpu_custom_call.1
$region0: #{tpu_custom_call.1}
  #allocation0 [shape = 'u32[]', space=smem, size = 0x4, offset = 0x4, fixed_abs, tag = 'smem constant byte address 0x4 - core index']
  #allocation1 [shape = 'u32[144,128]{1,0:T(1,128)}', space=vmem, size = 0x12000, scoped, tag = 'internal scratch']
  %s0 = inlined_call_operand.hbm [shape: f32[16,32], index: 0, kind: input, shape index: {}]
  %s1 = inlined_call_operand.hbm [shape: bf16[24,32], index: 1, kind: input, shape index: {}]
  %s2 = inlined_call_operand.vmem [shape: s32[3,1,16], index: 2, kind: input, shape index: {}]
  %s3 = inlined_call_operand.hbm [shape: f32[1,16], index: 3, kind: output, shape index: {}]
  %s4 = sld [smem:[#allocation0]]
  $region30: #{tpu_custom_call.1} parent=0
    _
  %s6 = ssub.s32 1, %s4
  %s7 = scalar_select 0, %s6, %s4
  $region1: #{tpu_custom_call.1} parent=0
    #allocation2 [shape = 'u8[8192]{0}', space=vmem, size = 0x2000, scoped, tag = 'input window, operand 0, single buffered']
    #allocation3 [shape = 's32[1]{0}', space=sflag, size = 0x4, scoped, tag = 'scoped memory for tpu_custom_call.1']
    #allocation4 [shape = 's32[1]{0}', space=sflag, size = 0x4, scoped, tag = 'scoped memory for tpu_custom_call.1']
    #allocation5 [shape = 'u8[6144]{0}', space=vmem, size = 0x1800, scoped, tag = 'input window, operand 1, single buffered']
    #allocation6 [shape = 's32[1]{0}', space=sflag, size = 0x4, scoped, tag = 'scoped memory for tpu_custom_call.1']
    #allocation7 [shape = 'u8[512]{0}', space=vmem, size = 0x400, scoped, tag = 'output window, operand 0, single buffered']
    %8 = vsyncpa [#allocation3], 0
    %9 = vsyncpa [#allocation6], 0
    %10 = vsyncpa [#allocation4], 0
    // Predicated region
    $region2: #{tpu_custom_call.1} parent=1 // pred_check
      _
    $region3: #{tpu_custom_call.1} parent=1 // pred_check_branch
      %12 = sbr.rel (0) target = $region5
    $region4: #{tpu_custom_call.1} parent=1 // pred_region
      %s14 = ssub.s32 256, 256
      %15 = vsyncadd [#allocation3], %s14
      %s16 = sshll.u32 [#allocation2], 4
      %s17 = int_to_ptr.vmem [resolvable:$true] %s16
      %22 = dma.hbm_to_vmem [thread:$0]  %s0, 256, %s17, [#allocation3], 128, 128, 8
    $region5: #{tpu_custom_call.1} parent=1 // pred_fallthru
      _
    // Predicated region
    $region6: #{tpu_custom_call.1} parent=1 // pred_check
      _
    $region7: #{tpu_custom_call.1} parent=1 // pred_check_branch
      %24 = sbr.rel (0) target = $region9
    $region8: #{tpu_custom_call.1} parent=1 // pred_region
      %s26 = ssub.s32 192, 192
      %27 = vsyncadd [#allocation6], %s26
      %s28 = sshll.u32 [#allocation5], 4
      %s29 = int_to_ptr.vmem [resolvable:$true] %s28
      %34 = dma.hbm_to_vmem [thread:$0]  %s1, 192, %s29, [#allocation6], 64, 64, 4
    $region9: #{tpu_custom_call.1} parent=1 // pred_fallthru
      _
    // Predicated region
    $region10: #{tpu_custom_call.1} parent=1 // pred_check
      _
    $region11: #{tpu_custom_call.1} parent=1 // pred_check_branch
      %36 = sbr.rel (0) target = $region13
    $region12: #{tpu_custom_call.1} parent=1 // pred_region
      _
    $region13: #{tpu_custom_call.1} parent=1 // pred_fallthru
      _
    // Predicated region
    $region14: #{tpu_custom_call.1} parent=1 // pred_check
      _
    $region15: #{tpu_custom_call.1} parent=1 // pred_check_branch
      %38 = sbr.rel (0) target = $region17
    $region16: #{tpu_custom_call.1} parent=1 // pred_region
      %39 = dma.done [#allocation3], 256
    $region17: #{tpu_custom_call.1} parent=1 // pred_fallthru
      _
    // Predicated region
    $region18: #{tpu_custom_call.1} parent=1 // pred_check
      _
    $region19: #{tpu_custom_call.1} parent=1 // pred_check_branch
      %41 = sbr.rel (0) target = $region21
    $region20: #{tpu_custom_call.1} parent=1 // pred_region
      %42 = dma.done [#allocation6], 192
    $region21: #{tpu_custom_call.1} parent=1 // pred_fallthru
      _
    %v44 = vld [vmem:[#allocation2] sm:$0xff]
    %v45 = vld [vmem:[#allocation2 + $0x8] sm:$0xff]
    %v46 = vld [vmem:[#allocation5] sm:$0xf]
    %v47 = vld [vmem:[#allocation5 + $0x4] sm:$0xf]
    %v48 = vld [vmem:[#allocation5 + $0x8] sm:$0xf]
    %v49 = vmul.f32 %v44, %v44
    %v50 = vmul.f32 %v45, %v45
    %vm51 = vcmask 261120
    %v52 = vsel %vm51, %v49, 0.0
    %53 = vadd.xlane.f32.xlu0 %v52
    %v54 = vpop.xlane.xlu0 %53
    %v55 = vsel %vm51, %v50, 0.0
    %56 = vadd.xlane.f32.xlu0 %v55
    %v57 = vpop.xlane.xlu0 %56
    %v58 = vmax.f32 %v54, 1e-24
    %v59 = vmax.f32 %v57, 1e-24
    %v60 = vrsqrt.pop %v58
    %v61 = vrsqrt.pop %v59
    %v62 = vmul.f32 %v44, %v60
    %v63 = vmul.f32 %v45, %v61
    %v64 = vpack.c.bf16 %v63, %v62
    %v68 = vunpack.c.l.b16 %v46
    %v69 = vunpack.c.l.b16 %v47
    %v70 = vunpack.c.l.b16 %v48
    %v71 = vpack.c.b16 %v69, %v68
    %v72 = vpack.c.b16 %v70, %v70
    %v74 = vsel %vm51, %v71, 0
    %v77 = vsel %vm51, %v72, 0
    %v80 = vsel %vm51, %v64, 0
    %82 = vmatprep.subr.bf16.mxu0 0
    %83 = vmatpush1.bf16.xpose.msra.mxu0 0
    %84 = vmatprep.subr.bf16.mxu0 0
    %85 = vmatpush1.bf16.xpose.msra.mxu0 0
    %86 = vmatprep.subr.bf16.mxu0 0
    %87 = vmatpush1.bf16.xpose.msra.mxu0 0
    %88 = vmatprep.subr.bf16.mxu0 0
    %89 = vmatpush1.bf16.xpose.msra.mxu0 0
    %90 = vmatprep.subr.bf16.mxu0 0
    %91 = vmatpush1.bf16.xpose.msra.mxu0 0
    %92 = vmatprep.subr.bf16.mxu0 0
    %93 = vmatpush1.bf16.xpose.msra.mxu0 0
    %94 = vmatprep.subr.bf16.mxu0 0
    %95 = vmatpush1.bf16.xpose.msra.mxu0 0
    %96 = vmatprep.subr.bf16.mxu0 0
    %97 = vmatpush1.bf16.xpose.msra.mxu0 %v80
    %98 = vmatprep.subr.bf16.mxu0 0
    %99 = vmatpush2.bf16.xpose.msra.mxu0 0
    %100 = vmatprep.subr.bf16.mxu0 0
    %101 = vmatpush2.bf16.xpose.msra.mxu0 0
    %102 = vmatprep.subr.bf16.mxu0 0
    %103 = vmatpush2.bf16.xpose.msra.mxu0 0
    %104 = vmatprep.subr.bf16.mxu0 0
    %105 = vmatpush2.bf16.xpose.msra.mxu0 0
    %106 = vmatprep.subr.bf16.mxu0 0
    %107 = vmatpush2.bf16.xpose.msra.mxu0 0
    %108 = vmatprep.subr.bf16.mxu0 0
    %109 = vmatpush2.bf16.xpose.msra.mxu0 0
    %110 = vmatprep.subr.bf16.mxu0 0
    %111 = vmatpush2.bf16.xpose.msra.mxu0 0
    %112 = vmatprep.subr.bf16.mxu0 0
    %113 = vmatpush2.bf16.xpose.msra.mxu0 0
    %114 = vmatprep.mubr.bf16.mxu0 0
    %115 = vmatmul.mubr.bf16.gmra.mxu0 %v74
    %v116 = vpop.f32.mrf.mxu0
    %v117 = vadd.f32 0.0, %v116
    %v118 = vpop.f32.mrf.mxu0
    %v119 = vpop.f32.mrf.mxu0
    %v120 = vadd.f32 0.0, %v119
    %v121 = vpop.f32.mrf.mxu0
    %122 = vmatprep.mubr.bf16.mxu0 0
    %123 = vmatmul.mubr.bf16.gmra.mxu0 %v77
    %v124 = vpop.f32.mrf.mxu0
    %v125 = vadd.f32 0.0, %v124
    %v126 = vpop.f32.mrf.mxu0
    %v127 = vpop.f32.mrf.mxu0
    %v128 = vpop.f32.mrf.mxu0
    %129 = vdwg.mxu0
    %v130 = vlaneseq
    %v131 = vshrl.u32 %v130, 7
    %vm132 = vcmp.lt.s32.totalorder %v131, 4
    %v133 = vld [vmem:[%s2] sm:$0x1]
    %v134 = vsel %vm132, %v117, -inf
    %vm135 = vcmask 130048
    %v136 = vsel %vm135, %v134, -inf
    %v137 = vrot.slane %v136, 4
    %v138 = vmax.f32 %v136, %v137
    %v139 = vrot.slane %v138, 2
    %v140 = vmax.f32 %v138, %v139
    %v141 = vrot.slane %v140, 1
    %v142 = vmax.f32 %v140, %v141
    %v143 = vsub.f32 %v117, %v142
    %v144 = vmul.f32 %v143, 1.442695
    %v145 = vpow.pop %v144
    %v146 = vsel %vm132, %v145, 0.0
    %v147 = vsel %vm135, %v146, 0.0
    %v148 = vrot.slane %v147, 4
    %v149 = vadd.f32 %v147, %v148
    %v150 = vrot.slane %v149, 2
    %v151 = vadd.f32 %v149, %v150
    %v152 = vrot.slane %v151, 1
    %v153 = vadd.f32 %v151, %v152
    %v154 = vlaneseq
    %v155 = vshrl.u32 %v154, 7
    %v156 = vsub.s32 0, %v155
    %v157 = vrot.slane %v133, %v156
    %vm158 = vcmp.eq.s32.totalorder %v131, %v157
    %v159 = vsel %vm158, %v117, 0.0
    %v160 = vsel %vm135, %v159, 0.0
    %v161 = vrot.slane %v160, 4
    %v162 = vadd.f32 %v160, %v161
    %v163 = vrot.slane %v162, 2
    %v164 = vadd.f32 %v162, %v163
    %v165 = vrot.slane %v164, 1
    %v166 = vadd.f32 %v164, %v165
    %v167 = vlog2.pop %v153
    %v168 = vmul.f32 %v167, 0.6931472
    %v169 = vadd.f32 %v142, %v168
    %v170 = vsub.f32 %v169, %v166
    %v171 = vadd.f32 %v170, 0.0
    %vm172 = vcmp.lt.s32.totalorder %v131, 6
    %s173 = scalar_lea.vmem %s2, 1
    %v174 = vld [vmem:[%s173] sm:$0x1]
    %v175 = vsel %vm172, %v120, -inf
    %v176 = vsel %vm135, %v175, -inf
    %v177 = vrot.slane %v176, 4
    %v178 = vmax.f32 %v176, %v177
    %v179 = vrot.slane %v178, 2
    %v180 = vmax.f32 %v178, %v179
    %v181 = vrot.slane %v180, 1
    %v182 = vmax.f32 %v180, %v181
    %v183 = vsub.f32 %v120, %v182
    %v184 = vmul.f32 %v183, 1.442695
    %v185 = vpow.pop %v184
    %v186 = vsel %vm172, %v185, 0.0
    %v187 = vsel %vm135, %v186, 0.0
    %v188 = vrot.slane %v187, 4
    %v189 = vadd.f32 %v187, %v188
    %v190 = vrot.slane %v189, 2
    %v191 = vadd.f32 %v189, %v190
    %v192 = vrot.slane %v191, 1
    %v193 = vadd.f32 %v191, %v192
    %v194 = vlaneseq
    %v195 = vshrl.u32 %v194, 7
    %v196 = vsub.s32 0, %v195
    %v197 = vrot.slane %v174, %v196
    %vm198 = vcmp.eq.s32.totalorder %v131, %v197
    %v199 = vsel %vm198, %v120, 0.0
    %v200 = vsel %vm135, %v199, 0.0
    %v201 = vrot.slane %v200, 4
    %v202 = vadd.f32 %v200, %v201
    %v203 = vrot.slane %v202, 2
    %v204 = vadd.f32 %v202, %v203
    %v205 = vrot.slane %v204, 1
    %v206 = vadd.f32 %v204, %v205
    %v207 = vlog2.pop %v193
    %v208 = vmul.f32 %v207, 0.6931472
    %v209 = vadd.f32 %v182, %v208
    %v210 = vsub.f32 %v209, %v206
    %v211 = vadd.f32 %v171, %v210
    %vm212 = vcmp.lt.s32.totalorder %v131, 8
    %s213 = scalar_lea.vmem %s2, 2
    %v214 = vld [vmem:[%s213] sm:$0x1]
    %v215 = vsel %vm212, %v125, -inf
    %v216 = vsel %vm135, %v215, -inf
    %v217 = vrot.slane %v216, 4
    %v218 = vmax.f32 %v216, %v217
    %v219 = vrot.slane %v218, 2
    %v220 = vmax.f32 %v218, %v219
    %v221 = vrot.slane %v220, 1
    %v222 = vmax.f32 %v220, %v221
    %v223 = vsub.f32 %v125, %v222
    %v224 = vmul.f32 %v223, 1.442695
    %v225 = vpow.pop %v224
    %v226 = vsel %vm212, %v225, 0.0
    %v227 = vsel %vm135, %v226, 0.0
    %v228 = vrot.slane %v227, 4
    %v229 = vadd.f32 %v227, %v228
    %v230 = vrot.slane %v229, 2
    %v231 = vadd.f32 %v229, %v230
    %v232 = vrot.slane %v231, 1
    %v233 = vadd.f32 %v231, %v232
    %v234 = vlaneseq
    %v235 = vshrl.u32 %v234, 7
    %v236 = vsub.s32 0, %v235
    %v237 = vrot.slane %v214, %v236
    %vm238 = vcmp.eq.s32.totalorder %v131, %v237
    %v239 = vsel %vm238, %v125, 0.0
    %v240 = vsel %vm135, %v239, 0.0
    %v241 = vrot.slane %v240, 4
    %v242 = vadd.f32 %v240, %v241
    %v243 = vrot.slane %v242, 2
    %v244 = vadd.f32 %v242, %v243
    %v245 = vrot.slane %v244, 1
    %v246 = vadd.f32 %v244, %v245
    %v247 = vlog2.pop %v233
    %v248 = vmul.f32 %v247, 0.6931472
    %v249 = vadd.f32 %v222, %v248
    %v250 = vsub.f32 %v249, %v246
    %v251 = vadd.f32 %v211, %v250
    %vm252 = vcmask 122880
    %253 = vst.msk [vmem:[#allocation7] sm:$0x1] %vm252, %v251
    // Predicated region
    $region22: #{tpu_custom_call.1} parent=1 // pred_check
      _
    $region23: #{tpu_custom_call.1} parent=1 // pred_check_branch
      %255 = sbr.rel (0) target = $region25
    $region24: #{tpu_custom_call.1} parent=1 // pred_region
      %s257 = ssub.s32 16, 16
      %258 = vsyncadd [#allocation4], %s257
      %s260 = sshll.u32 [#allocation7], 4
      %s261 = int_to_ptr.vmem [resolvable:$true] %s260
      %263 = dma.vmem_to_hbm [thread:$0]  %s261, 16, %s3, [#allocation4]
    $region25: #{tpu_custom_call.1} parent=1 // pred_fallthru
      _
    // Predicated region
    $region26: #{tpu_custom_call.1} parent=1 // pred_check
      _
    $region27: #{tpu_custom_call.1} parent=1 // pred_check_branch
      %265 = sbr.rel (0) target = $region29
    $region28: #{tpu_custom_call.1} parent=1 // pred_region
      %266 = dma.done [#allocation4], 16
    $region29: #{tpu_custom_call.1} parent=1 // pred_fallthru
      _
    %267 = vsyncpa [#allocation3], 1
    %268 = vsyncpa [#allocation6], 1
    %269 = vsyncpa [#allocation4], 1

</llo_original>
